<compile_context>
chip_gen: v6e
topology: v6e:2x2x1
jax: 0.10.0
libtpu: 0.0.40
codegen_flags: <defaults>
</compile_context>

<pallas_src>
import math

import jax
import jax.numpy as jnp
from jax.experimental import pallas as pl
from jax.experimental.pallas import tpu as pltpu

_INV_SQRT2 = 1.0 / math.sqrt(2.0)


def _mlp_kernel(x_ref, w1_ref, b1_ref, w2_ref, b2_ref, o_ref, acc_ref):
    # Grid: (token tiles [parallel], D_h chunks [arbitrary / reduction]).
    # x_ref:  (tile_n, D_in)      [compute dtype, e.g. bf16]
    # w1_ref: (D_in, tk_h)        b1_ref: (1, tk_h)      [w: compute, b: f32]
    # w2_ref: (tk_h, D_out)       b2_ref: (1, D_out)
    # o_ref:  (tile_n, D_out)     acc_ref: (tile_n, D_out) f32 scratch
    k = pl.program_id(1)

    @pl.when(k == 0)
    def _init():
        acc_ref[...] = jnp.zeros_like(acc_ref)

    h = jnp.dot(x_ref[...], w1_ref[...], preferred_element_type=jnp.float32)
    h = h + b1_ref[...]
    # Exact GELU (erf formulation) == torch.nn.GELU() default; elementwise, so
    # applying it per D_h-chunk is exact.
    h = 0.5 * h * (1.0 + jax.lax.erf(h * _INV_SQRT2))
    acc_ref[...] += jnp.dot(h.astype(w2_ref.dtype), w2_ref[...],
                            preferred_element_type=jnp.float32)

    @pl.when(k == pl.num_programs(1) - 1)
    def _finalize():
        o_ref[...] = (acc_ref[...] + b2_ref[...]).astype(o_ref.dtype)


def _round_up(x, m):
    return (x + m - 1) // m * m


def _largest_chunk(total, target):
    """Largest divisor of `total` that is a multiple of 128 and <= target."""
    target = max(128, target)
    m = total // 128
    best = 1
    for d in range(1, m + 1):
        if m % d == 0 and 128 * d <= target:
            best = d
    return 128 * best


def _pad_to(a, shape, dtype):
    """Cast/pad only when needed (skip no-op host copies)."""
    if a.dtype != dtype:
        a = a.astype(dtype)
    if a.shape == shape:
        return a
    return jnp.pad(a, [(0, s - d) for d, s in zip(a.shape, shape)])


def projection_module(x, w1, b1, w2, b2, *, tile_n=None, tk_h=None,
                      compute_dtype=jnp.bfloat16, force_pallas=False):
    """y = GELU(x @ w1 + b1, exact) @ w2 + b2  (== ProjectionModule.forward).

    x: [..., mm_hidden]; w1: [mm_hidden, hidden]; w2: [hidden, hidden]
    (weights stored [in, out], i.e. pre-transposed vs torch's [out, in]).
    Matmuls run in bf16 with f32 accumulation -> up to ~1e-2 relative error
    vs an f32 torch reference.
    """
    orig_shape = x.shape
    out_dtype = x.dtype
    d_in, d_h = w1.shape
    d_out = w2.shape[1]

    # Tiny feature dims: after padding 32->128 most MXU work is on zeros and the
    # pad/slice traffic dominates -> plain XLA path unless forced to use Pallas.
    if not force_pallas and max(d_in, d_h, d_out) < 128:
        h = jax.nn.gelu(jnp.dot(x, w1) + b1, approximate=False)
        return (jnp.dot(h, w2) + b2).astype(out_dtype)

    # ---- generation-aware VMEM budget --------------------------------------
    try:
        vmem_cap = int(pltpu.get_tpu_info().vmem_capacity_bytes)
    except Exception:
        vmem_cap = 64 << 20          # conservative (v7x per-TC size)

    # ---- lane-dense padding targets (feature dims -> multiples of 128) ------
    d_in_p = _round_up(d_in, 128)
    d_h_p = _round_up(d_h, 128)
    d_out_p = _round_up(d_out, 128)

    x2 = x.reshape(-1, d_in)
    n = x2.shape[0]

    # ---- row tile: multiple of 16 (bf16 packing); bigger on 128-MiB chips ---
    if tile_n is None:
        tile_n = 512 if vmem_cap >= (96 << 20) else 256
    tile = max(16, min(_round_up(tile_n, 16), _round_up(n, 16)))

    # ---- D_h chunk: divisor of d_h_p, multiple of 128 ------------------------
    if tk_h is None:
        tk_h = 2048 if vmem_cap >= (96 << 20) else 1024
    tk = _largest_chunk(d_h_p, tk_h)

    cdt = jnp.dtype(compute_dtype)
    cb = cdt.itemsize
    ob = jnp.dtype(out_dtype).itemsize

    def _residency(t, c):
        return (2 * t * d_in_p * cb               # x tile (double-buffered)
                + 2 * t * d_out_p * ob            # out tile (double-buffered)
                + 2 * (d_in_p + d_out_p) * c * cb # w1/w2 chunks (double-buffered)
                + 2 * (c + d_out_p) * 4           # b1 chunk + b2 (f32)
                + t * d_out_p * 4                 # f32 accumulator scratch
                + 3 * t * c * 4)                  # h / GELU / cast temporaries

    budget = int(0.7 * vmem_cap)
    while _residency(tile, tk) > budget and tk > 128:
        tk = _largest_chunk(d_h_p, tk // 2)
    while _residency(tile, tk) > budget and tile > 64:
        tile = max(64, _round_up(tile // 2, 16))

    n_p = _round_up(n, tile)

    vmem_limit = int(1.3 * _residency(tile, tk)) + (4 << 20)
    vmem_limit = max(16 << 20, min(vmem_limit, int(0.85 * vmem_cap)))

    # ---- pad / cast only when not already in target shape & dtype -----------
    x_p = _pad_to(x2, (n_p, d_in_p), cdt)
    w1_p = _pad_to(w1, (d_in_p, d_h_p), cdt)
    w2_p = _pad_to(w2, (d_h_p, d_out_p), cdt)
    b1_p = _pad_to(b1.reshape(1, -1), (1, d_h_p), jnp.float32)
    b2_p = _pad_to(b2.reshape(1, -1), (1, d_out_p), jnp.float32)

    out = pl.pallas_call(
        _mlp_kernel,
        out_shape=jax.ShapeDtypeStruct((n_p, d_out_p), out_dtype),
        grid_spec=pltpu.PrefetchScalarGridSpec(
            num_scalar_prefetch=0,
            grid=(n_p // tile, d_h_p // tk),
            in_specs=[
                pl.BlockSpec((tile, d_in_p), lambda i, k: (i, 0)),
                pl.BlockSpec((d_in_p, tk), lambda i, k: (0, k)),
                pl.BlockSpec((1, tk), lambda i, k: (0, k)),
                pl.BlockSpec((tk, d_out_p), lambda i, k: (k, 0)),
                pl.BlockSpec((1, d_out_p), lambda i, k: (0, 0)),
            ],
            out_specs=pl.BlockSpec((tile, d_out_p), lambda i, k: (i, 0)),
            scratch_shapes=[pltpu.VMEM((tile, d_out_p), jnp.float32)],
        ),
        compiler_params=pltpu.CompilerParams(
            dimension_semantics=("parallel", "arbitrary"),
            vmem_limit_bytes=vmem_limit),
    )(x_p, w1_p, b1_p, w2_p, b2_p)

    if (n_p, d_out_p) != (n, d_out):
        out = out[:n, :d_out]
    return out.reshape(orig_shape[:-1] + (d_out,))


def _init_linear(key, in_features, out_features, dtype=jnp.float32):
    # Deterministic init mimicking torch.nn.Linear defaults (U(+/-1/sqrt(fan_in))).
    kw, kb = jax.random.split(key)
    bound = 1.0 / math.sqrt(in_features)
    # Stored as [in, out] (already transposed relative to PyTorch's [out, in]).
    w = jax.random.uniform(kw, (in_features, out_features), dtype, -bound, bound)
    b = jax.random.uniform(kb, (out_features,), dtype, -bound, bound)
    return w, b


if __name__ == "__main__":
    mm_hidden_size = 32
    hidden_size = 32
    batch, seq = 2, 8

    key = jax.random.PRNGKey(0)
    kx, k1, k2 = jax.random.split(key, 3)

    x = jax.random.normal(kx, (batch, seq, mm_hidden_size), jnp.float32)
    w1, b1 = _init_linear(k1, mm_hidden_size, hidden_size)
    w2, b2 = _init_linear(k2, hidden_size, hidden_size)

    # force_pallas so this toy 32->32 config exercises the kernel rather than
    # the small-dim XLA fast path.
    out = projection_module(x, w1, b1, w2, b2, force_pallas=True)
    out = jax.block_until_ready(out)

    # Sanity check against pure-JAX f32 reference (kernel matmuls are bf16 with
    # f32 accumulation -> loosened tolerance).
    ref = jax.nn.gelu(x @ w1 + b1, approximate=False) @ w2 + b2
    assert out.shape == (batch, seq, hidden_size)
    assert jnp.allclose(out, ref, atol=2e-2, rtol=2e-2), float(
        jnp.max(jnp.abs(out - ref)))

    print("KERNEL_OK")
</pallas_src>

<mosaic_0001>
module attributes {stable_mosaic.version = 11 : i64} {
  func.func @_mlp_kernel(%arg0: i32, %arg1: i32, %arg2: memref<16x128xbf16, #tpu.memory_space<vmem>>, %arg3: memref<128x128xbf16, #tpu.memory_space<vmem>>, %arg4: memref<1x128xf32, #tpu.memory_space<vmem>>, %arg5: memref<128x128xbf16, #tpu.memory_space<vmem>>, %arg6: memref<1x128xf32, #tpu.memory_space<vmem>>, %arg7: memref<16x128xf32, #tpu.memory_space<vmem>>, %arg8: memref<16x128xf32, #tpu.memory_space<vmem>>) attributes {dimension_semantics = [#tpu.dimension_semantics<parallel>, #tpu.dimension_semantics<arbitrary>], iteration_bounds = array<i64: 1, 1>, scalar_prefetch = 0 : i64, scratch_operands = 1 : i64, tpu.core_type = #tpu.core_type<tc>, window_params = [{transform_indices = @transform_0, window_bounds = array<i64: 16, 128>}, {transform_indices = @transform_1, window_bounds = array<i64: 128, 128>}, {transform_indices = @transform_2, window_bounds = array<i64: 1, 128>}, {transform_indices = @transform_3, window_bounds = array<i64: 128, 128>}, {pipeline_mode = #tpu.pipeline_mode<synchronous>, transform_indices = @transform_4, window_bounds = array<i64: 1, 128>}, {transform_indices = @transform_5, window_bounds = array<i64: 16, 128>}]} {
    %c0_i32 = arith.constant 0 : i32
    %0 = arith.cmpi eq, %arg1, %c0_i32 : i32
    %1 = arith.extui %0 : i1 to i32
    %c0_i32_0 = arith.constant 0 : i32
    %2 = arith.cmpi ne, %1, %c0_i32_0 : i32
    scf.if %2 {
      %cst_18 = arith.constant 0.000000e+00 : f32
      %26 = vector.broadcast %cst_18 : f32 to vector<16x128xf32>
      %c0_19 = arith.constant 0 : index
      %c0_20 = arith.constant 0 : index
      %27 = vector.load %arg8[%c0_19, %c0_20] : memref<16x128xf32, #tpu.memory_space<vmem>>, vector<16x128xf32>
      tpu.vector_store %arg8[%c0_19, %c0_20], %26 {strides = array<i32>} : memref<16x128xf32, #tpu.memory_space<vmem>>, vector<16x128xf32>,
    } else {
    }
    %c0 = arith.constant 0 : index
    %c0_1 = arith.constant 0 : index
    %3 = vector.load %arg2[%c0, %c0_1] : memref<16x128xbf16, #tpu.memory_space<vmem>>, vector<16x128xbf16>
    %c0_2 = arith.constant 0 : index
    %c0_3 = arith.constant 0 : index
    %4 = vector.load %arg3[%c0_2, %c0_3] : memref<128x128xbf16, #tpu.memory_space<vmem>>, vector<128x128xbf16>
    %cst = arith.constant dense<0.000000e+00> : vector<16x128xf32>
    %5 = tpu.matmul %3, %4, %cst {dimension_numbers = #tpu.dot_dimension_numbers<[1], [0], [0], [1], [0, 0, 1, 1], [], []>} : vector<16x128xbf16>, vector<128x128xbf16>, vector<16x128xf32> -> vector<16x128xf32>
    %c0_4 = arith.constant 0 : index
    %c0_5 = arith.constant 0 : index
    %6 = vector.load %arg4[%c0_4, %c0_5] : memref<1x128xf32, #tpu.memory_space<vmem>>, vector<1x128xf32>
    %7 = vector.broadcast %6 : vector<1x128xf32> to vector<16x128xf32>
    %8 = arith.addf %5, %7 : vector<16x128xf32>
    %cst_6 = arith.constant 5.000000e-01 : f32
    %9 = vector.broadcast %cst_6 : f32 to vector<16x128xf32>
    %10 = arith.mulf %9, %8 : vector<16x128xf32>
    %cst_7 = arith.constant 0.707106769 : f32
    %11 = vector.broadcast %cst_7 : f32 to vector<16x128xf32>
    %12 = arith.mulf %8, %11 : vector<16x128xf32>
    %13 = math.erf %12 : vector<16x128xf32>
    %cst_8 = arith.constant 1.000000e+00 : f32
    %14 = vector.broadcast %cst_8 : f32 to vector<16x128xf32>
    %15 = arith.addf %14, %13 : vector<16x128xf32>
    %16 = arith.mulf %10, %15 : vector<16x128xf32>
    %c0_9 = arith.constant 0 : index
    %c0_10 = arith.constant 0 : index
    %17 = vector.load %arg8[%c0_9, %c0_10] : memref<16x128xf32, #tpu.memory_space<vmem>>, vector<16x128xf32>
    %18 = arith.truncf %16 : vector<16x128xf32> to vector<16x128xbf16>
    %c0_11 = arith.constant 0 : index
    %c0_12 = arith.constant 0 : index
    %19 = vector.load %arg5[%c0_11, %c0_12] : memref<128x128xbf16, #tpu.memory_space<vmem>>, vector<128x128xbf16>
    %cst_13 = arith.constant dense<0.000000e+00> : vector<16x128xf32>
    %20 = tpu.matmul %18, %19, %cst_13 {dimension_numbers = #tpu.dot_dimension_numbers<[1], [0], [0], [1], [0, 0, 1, 1], [], []>} : vector<16x128xbf16>, vector<128x128xbf16>, vector<16x128xf32> -> vector<16x128xf32>
    %21 = arith.addf %17, %20 : vector<16x128xf32>
    %c0_14 = arith.constant 0 : index
    %c0_15 = arith.constant 0 : index
    %22 = vector.load %arg8[%c0_14, %c0_15] : memref<16x128xf32, #tpu.memory_space<vmem>>, vector<16x128xf32>
    tpu.vector_store %arg8[%c0_14, %c0_15], %21 {strides = array<i32>} : memref<16x128xf32, #tpu.memory_space<vmem>>, vector<16x128xf32>,
    %c0_i32_16 = arith.constant 0 : i32
    %23 = arith.cmpi eq, %arg1, %c0_i32_16 : i32
    %24 = arith.extui %23 : i1 to i32
    %c0_i32_17 = arith.constant 0 : i32
    %25 = arith.cmpi ne, %24, %c0_i32_17 : i32
    scf.if %25 {
      %c0_18 = arith.constant 0 : index
      %c0_19 = arith.constant 0 : index
      %26 = vector.load %arg8[%c0_18, %c0_19] : memref<16x128xf32, #tpu.memory_space<vmem>>, vector<16x128xf32>
      %c0_20 = arith.constant 0 : index
      %c0_21 = arith.constant 0 : index
      %27 = vector.load %arg6[%c0_20, %c0_21] : memref<1x128xf32, #tpu.memory_space<vmem>>, vector<1x128xf32>
      %28 = vector.broadcast %27 : vector<1x128xf32> to vector<16x128xf32>
      %29 = arith.addf %26, %28 : vector<16x128xf32>
      %c0_22 = arith.constant 0 : index
      %c0_23 = arith.constant 0 : index
      %30 = vector.load %arg7[%c0_22, %c0_23] : memref<16x128xf32, #tpu.memory_space<vmem>>, vector<16x128xf32>
      tpu.vector_store %arg7[%c0_22, %c0_23], %29 {strides = array<i32>} : memref<16x128xf32, #tpu.memory_space<vmem>>, vector<16x128xf32>,
    } else {
    }
    return
  }
  func.func @transform_0(%arg0: i32, %arg1: i32) -> (i32, i32) {
    %c0_i32 = arith.constant 0 : i32
    %c0_i32_0 = arith.constant 0 : i32
    return %arg0, %c0_i32 : i32, i32
  }
  func.func @transform_1(%arg0: i32, %arg1: i32) -> (i32, i32) {
    %c0_i32 = arith.constant 0 : i32
    %c0_i32_0 = arith.constant 0 : i32
    return %c0_i32, %arg1 : i32, i32
  }
  func.func @transform_2(%arg0: i32, %arg1: i32) -> (i32, i32) {
    %c0_i32 = arith.constant 0 : i32
    %c0_i32_0 = arith.constant 0 : i32
    return %c0_i32, %arg1 : i32, i32
  }
  func.func @transform_3(%arg0: i32, %arg1: i32) -> (i32, i32) {
    %c0_i32 = arith.constant 0 : i32
    %c0_i32_0 = arith.constant 0 : i32
    return %arg1, %c0_i32 : i32, i32
  }
  func.func @transform_4(%arg0: i32, %arg1: i32) -> (i32, i32) {
    %c0_i32 = arith.constant 0 : i32
    %c0_i32_0 = arith.constant 0 : i32
    %c0_i32_1 = arith.constant 0 : i32
    return %c0_i32, %c0_i32_0 : i32, i32
  }
  func.func @transform_5(%arg0: i32, %arg1: i32) -> (i32, i32) {
    %c0_i32 = arith.constant 0 : i32
    %c0_i32_0 = arith.constant 0 : i32
    return %arg0, %c0_i32 : i32, i32
  }
}

</mosaic_0001>

<llo_original>
// kernel: tpu_custom_call.1
$region0: #{tpu_custom_call.1}
  #allocation0 [shape = 'u32[]', space=smem, size = 0x4, offset = 0x4, fixed_abs, tag = 'smem constant byte address 0x4 - core index']
  #allocation1 [shape = 'u32[144,128]{1,0:T(1,128)}', space=vmem, size = 0x12000, scoped, tag = 'internal scratch']
  #allocation2 [shape = 'f32[16,128]{1,0:T(8,128)}', space=vmem, size = 0x2000, scoped, tag = 'scratch operand']
  %s0 = inlined_call_operand.hbm [shape: bf16[16,128], index: 0, kind: input, shape index: {}]
  %s1 = inlined_call_operand.hbm [shape: bf16[128,128], index: 1, kind: input, shape index: {}]
  %s2 = inlined_call_operand.vmem [shape: f32[1,128], index: 2, kind: input, shape index: {}]
  %s3 = inlined_call_operand.hbm [shape: bf16[128,128], index: 3, kind: input, shape index: {}]
  %s4 = inlined_call_operand.vmem [shape: f32[1,128], index: 4, kind: input, shape index: {}]
  %s5 = inlined_call_operand.hbm [shape: f32[16,128], index: 5, kind: output, shape index: {}]
  %s6 = sld [smem:[#allocation0]]
  $region50: #{tpu_custom_call.1} parent=0
    _
  %s8 = ssub.s32 1, %s6
  %s9 = scalar_select 0, %s8, %s6
  $region1: #{tpu_custom_call.1} parent=0
    #allocation3 [shape = 'u8[4096]{0}', space=vmem, size = 0x1000, scoped, tag = 'input window, operand 0, single buffered']
    #allocation4 [shape = 's32[1]{0}', space=sflag, size = 0x4, scoped, tag = 'scoped memory for tpu_custom_call.1']
    #allocation5 [shape = 's32[1]{0}', space=sflag, size = 0x4, scoped, tag = 'scoped memory for tpu_custom_call.1']
    #allocation6 [shape = 'u8[32768]{0}', space=vmem, size = 0x8000, scoped, tag = 'input window, operand 1, single buffered']
    #allocation7 [shape = 's32[1]{0}', space=sflag, size = 0x4, scoped, tag = 'scoped memory for tpu_custom_call.1']
    #allocation8 [shape = 'u8[32768]{0}', space=vmem, size = 0x8000, scoped, tag = 'input window, operand 3, single buffered']
    #allocation9 [shape = 'u8[8192]{0}', space=vmem, size = 0x2000, scoped, tag = 'output window, operand 0, single buffered']
    %10 = vsyncpa [#allocation4], 0
    %11 = vsyncpa [#allocation7], 0
    %12 = vsyncpa [#allocation5], 0
    // Predicated region
    $region2: #{tpu_custom_call.1} parent=1 // pred_check
      _
    $region3: #{tpu_custom_call.1} parent=1 // pred_check_branch
      %14 = sbr.rel (0) target = $region5
    $region4: #{tpu_custom_call.1} parent=1 // pred_region
      %s16 = ssub.s32 128, 128
      %17 = vsyncadd [#allocation4], %s16
      %s18 = sshll.u32 [#allocation3], 4
      %s19 = int_to_ptr.vmem [resolvable:$true] %s18
      %24 = dma.hbm_to_vmem [thread:$0]  %s0, 128, %s19, [#allocation4], 64, 64, 4
    $region5: #{tpu_custom_call.1} parent=1 // pred_fallthru
      _
    // Predicated region
    $region6: #{tpu_custom_call.1} parent=1 // pred_check
      _
    $region7: #{tpu_custom_call.1} parent=1 // pred_check_branch
      %26 = sbr.rel (0) target = $region9
    $region8: #{tpu_custom_call.1} parent=1 // pred_region
      %s28 = ssub.s32 1024, 1024
      %29 = vsyncadd [#allocation7], %s28
      %s30 = sshll.u32 [#allocation6], 4
      %s31 = int_to_ptr.vmem [resolvable:$true] %s30
      %36 = dma.hbm_to_vmem [thread:$0]  %s1, 1024, %s31, [#allocation7], 64, 64, 4
    $region9: #{tpu_custom_call.1} parent=1 // pred_fallthru
      _
    // Predicated region
    $region10: #{tpu_custom_call.1} parent=1 // pred_check
      _
    $region11: #{tpu_custom_call.1} parent=1 // pred_check_branch
      %38 = sbr.rel (0) target = $region13
    $region12: #{tpu_custom_call.1} parent=1 // pred_region
      _
    $region13: #{tpu_custom_call.1} parent=1 // pred_fallthru
      _
    // Predicated region
    $region14: #{tpu_custom_call.1} parent=1 // pred_check
      _
    $region15: #{tpu_custom_call.1} parent=1 // pred_check_branch
      %40 = sbr.rel (0) target = $region17
    $region16: #{tpu_custom_call.1} parent=1 // pred_region
      %s42 = ssub.s32 1024, 1024
      %43 = vsyncadd [#allocation7], %s42
      %s44 = sshll.u32 [#allocation8], 4
      %s45 = int_to_ptr.vmem [resolvable:$true] %s44
      %50 = dma.hbm_to_vmem [thread:$0]  %s3, 1024, %s45, [#allocation7], 64, 64, 4
    $region17: #{tpu_custom_call.1} parent=1 // pred_fallthru
      _
    // Predicated region
    $region18: #{tpu_custom_call.1} parent=1 // pred_check
      _
    $region19: #{tpu_custom_call.1} parent=1 // pred_check_branch
      %52 = sbr.rel (0) target = $region21
    $region20: #{tpu_custom_call.1} parent=1 // pred_region
      _
    $region21: #{tpu_custom_call.1} parent=1 // pred_fallthru
      _
    // Predicated region
    $region22: #{tpu_custom_call.1} parent=1 // pred_check
      _
    $region23: #{tpu_custom_call.1} parent=1 // pred_check_branch
      %54 = sbr.rel (0) target = $region25
    $region24: #{tpu_custom_call.1} parent=1 // pred_region
      %55 = dma.done [#allocation4], 128
    $region25: #{tpu_custom_call.1} parent=1 // pred_fallthru
      _
    // Predicated region
    $region26: #{tpu_custom_call.1} parent=1 // pred_check
      _
    $region27: #{tpu_custom_call.1} parent=1 // pred_check_branch
      %57 = sbr.rel (0) target = $region29
    $region28: #{tpu_custom_call.1} parent=1 // pred_region
      %58 = dma.done [#allocation7], 1024
    $region29: #{tpu_custom_call.1} parent=1 // pred_fallthru
      _
    // Predicated region
    $region30: #{tpu_custom_call.1} parent=1 // pred_check
      _
    $region31: #{tpu_custom_call.1} parent=1 // pred_check_branch
      %60 = sbr.rel (0) target = $region33
    $region32: #{tpu_custom_call.1} parent=1 // pred_region
      %61 = dma.done [#allocation7], 1024
    $region33: #{tpu_custom_call.1} parent=1 // pred_fallthru
      _
    %p63 = scmp.eq.s32.totalorder 0, 0
    // Predicated region
    $region34: #{tpu_custom_call.1} parent=1 // pred_check
      %p64 = pneg %p63
    $region35: #{tpu_custom_call.1} parent=1 // pred_check_branch
      %66 = sbr.rel (%p64) target = $region37
    $region36: #{tpu_custom_call.1} parent=1 // pred_region
      %67 = vst [vmem:[#allocation2] sm:$0xff] 0.0
      %68 = vst [vmem:[#allocation2 + $0x8] sm:$0xff] 0.0
    $region37: #{tpu_custom_call.1} parent=1 // pred_fallthru
      _
    %v69 = vld [vmem:[#allocation3] sm:$0xf]
    %v70 = vld [vmem:[#allocation3 + $0x4] sm:$0xf]
    %v71 = vld [vmem:[#allocation6] sm:$0xf]
    %v72 = vld [vmem:[#allocation6 + $0x4] sm:$0xf]
    %v73 = vld [vmem:[#allocation6 + $0x8] sm:$0xf]
    %v74 = vld [vmem:[#allocation6 + $0xc] sm:$0xf]
    %v75 = vld [vmem:[#allocation6 + $0x10] sm:$0xf]
    %v76 = vld [vmem:[#allocation6 + $0x14] sm:$0xf]
    %v77 = vld [vmem:[#allocation6 + $0x18] sm:$0xf]
    %v78 = vld [vmem:[#allocation6 + $0x1c] sm:$0xf]
    %v79 = vld [vmem:[#allocation6 + $0x20] sm:$0xf]
    %v80 = vld [vmem:[#allocation6 + $0x24] sm:$0xf]
    %v81 = vld [vmem:[#allocation6 + $0x28] sm:$0xf]
    %v82 = vld [vmem:[#allocation6 + $0x2c] sm:$0xf]
    %v83 = vld [vmem:[#allocation6 + $0x30] sm:$0xf]
    %v84 = vld [vmem:[#allocation6 + $0x34] sm:$0xf]
    %v85 = vld [vmem:[#allocation6 + $0x38] sm:$0xf]
    %v86 = vld [vmem:[#allocation6 + $0x3c] sm:$0xf]
    %v87 = vld [vmem:[%s2] sm:$0x1]
    %v89 = vlaneseq
    %v90 = vshrl.u32 %v89, 7
    %v91 = vsub.s32 0, %v90
    %v92 = vrot.slane %v87, %v91
    %v96 = vunpack.c.l.b16 %v69
    %v97 = vunpack.c.l.b16 %v70
    %v98 = vpack.c.b16 %v97, %v96
    %v116 = vunpack.c.l.b16 %v71
    %v117 = vunpack.c.l.b16 %v72
    %v118 = vunpack.c.l.b16 %v73
    %v119 = vunpack.c.l.b16 %v74
    %v120 = vunpack.c.l.b16 %v75
    %v121 = vunpack.c.l.b16 %v76
    %v122 = vunpack.c.l.b16 %v77
    %v123 = vunpack.c.l.b16 %v78
    %v124 = vunpack.c.l.b16 %v79
    %v125 = vunpack.c.l.b16 %v80
    %v126 = vunpack.c.l.b16 %v81
    %v127 = vunpack.c.l.b16 %v82
    %v128 = vunpack.c.l.b16 %v83
    %v129 = vunpack.c.l.b16 %v84
    %v130 = vunpack.c.l.b16 %v85
    %v131 = vunpack.c.l.b16 %v86
    %v132 = vpack.c.b16 %v117, %v116
    %v133 = vpack.c.b16 %v119, %v118
    %v134 = vpack.c.b16 %v121, %v120
    %v135 = vpack.c.b16 %v123, %v122
    %v136 = vpack.c.b16 %v125, %v124
    %v137 = vpack.c.b16 %v127, %v126
    %v138 = vpack.c.b16 %v129, %v128
    %v139 = vpack.c.b16 %v131, %v130
    %148 = vmatprep.subr.bf16.mxu0 0
    %149 = vmatpush1.bf16.msra.mxu0 %v139
    %150 = vmatprep.subr.bf16.mxu0 0
    %151 = vmatpush1.bf16.msra.mxu0 %v138
    %152 = vmatprep.subr.bf16.mxu0 0
    %153 = vmatpush1.bf16.msra.mxu0 %v137
    %154 = vmatprep.subr.bf16.mxu0 0
    %155 = vmatpush1.bf16.msra.mxu0 %v136
    %156 = vmatprep.subr.bf16.mxu0 0
    %157 = vmatpush1.bf16.msra.mxu0 %v135
    %158 = vmatprep.subr.bf16.mxu0 0
    %159 = vmatpush1.bf16.msra.mxu0 %v134
    %160 = vmatprep.subr.bf16.mxu0 0
    %161 = vmatpush1.bf16.msra.mxu0 %v133
    %162 = vmatprep.subr.bf16.mxu0 0
    %163 = vmatpush1.bf16.msra.mxu0 %v132
    %164 = vmatprep.subr.bf16.mxu0 0
    %165 = vmatpush2.bf16.msra.mxu0 0
    %166 = vmatprep.subr.bf16.mxu0 0
    %167 = vmatpush2.bf16.msra.mxu0 0
    %168 = vmatprep.subr.bf16.mxu0 0
    %169 = vmatpush2.bf16.msra.mxu0 0
    %170 = vmatprep.subr.bf16.mxu0 0
    %171 = vmatpush2.bf16.msra.mxu0 0
    %172 = vmatprep.subr.bf16.mxu0 0
    %173 = vmatpush2.bf16.msra.mxu0 0
    %174 = vmatprep.subr.bf16.mxu0 0
    %175 = vmatpush2.bf16.msra.mxu0 0
    %176 = vmatprep.subr.bf16.mxu0 0
    %177 = vmatpush2.bf16.msra.mxu0 0
    %178 = vmatprep.subr.bf16.mxu0 0
    %179 = vmatpush2.bf16.msra.mxu0 0
    %180 = vmatprep.mubr.bf16.mxu0 0
    %181 = vmatmul.mubr.bf16.gmra.mxu0 %v98
    %v182 = vpop.f32.mrf.mxu0
    %v183 = vadd.f32 %v92, %v182
    %v184 = vpop.f32.mrf.mxu0
    %v185 = vpop.f32.mrf.mxu0
    %v186 = vadd.f32 %v92, %v185
    %v187 = vpop.f32.mrf.mxu0
    %188 = vdwg.mxu0
    %v189 = vmul.f32 %v183, 0.5
    %v190 = vmul.f32 %v186, 0.5
    %v191 = vmul.f32 %v183, 0.70710677
    %v192 = vmul.f32 %v186, 0.70710677
    %v193 = verf.f32.pop %v191
    %v194 = verf.f32.pop %v192
    %v195 = vadd.f32 %v193, 1.0
    %v196 = vadd.f32 %v194, 1.0
    %v197 = vmul.f32 %v189, %v195
    %v198 = vmul.f32 %v190, %v196
    %v199 = vld [vmem:[#allocation2] sm:$0xff]
    %v200 = vld [vmem:[#allocation2 + $0x8] sm:$0xff]
    %v201 = vpack.c.bf16 %v198, %v197
    %v202 = vld [vmem:[#allocation8] sm:$0xf]
    %v203 = vld [vmem:[#allocation8 + $0x4] sm:$0xf]
    %v204 = vld [vmem:[#allocation8 + $0x8] sm:$0xf]
    %v205 = vld [vmem:[#allocation8 + $0xc] sm:$0xf]
    %v206 = vld [vmem:[#allocation8 + $0x10] sm:$0xf]
    %v207 = vld [vmem:[#allocation8 + $0x14] sm:$0xf]
    %v208 = vld [vmem:[#allocation8 + $0x18] sm:$0xf]
    %v209 = vld [vmem:[#allocation8 + $0x1c] sm:$0xf]
    %v210 = vld [vmem:[#allocation8 + $0x20] sm:$0xf]
    %v211 = vld [vmem:[#allocation8 + $0x24] sm:$0xf]
    %v212 = vld [vmem:[#allocation8 + $0x28] sm:$0xf]
    %v213 = vld [vmem:[#allocation8 + $0x2c] sm:$0xf]
    %v214 = vld [vmem:[#allocation8 + $0x30] sm:$0xf]
    %v215 = vld [vmem:[#allocation8 + $0x34] sm:$0xf]
    %v216 = vld [vmem:[#allocation8 + $0x38] sm:$0xf]
    %v217 = vld [vmem:[#allocation8 + $0x3c] sm:$0xf]
    %v234 = vunpack.c.l.b16 %v202
    %v235 = vunpack.c.l.b16 %v203
    %v236 = vunpack.c.l.b16 %v204
    %v237 = vunpack.c.l.b16 %v205
    %v238 = vunpack.c.l.b16 %v206
    %v239 = vunpack.c.l.b16 %v207
    %v240 = vunpack.c.l.b16 %v208
    %v241 = vunpack.c.l.b16 %v209
    %v242 = vunpack.c.l.b16 %v210
    %v243 = vunpack.c.l.b16 %v211
    %v244 = vunpack.c.l.b16 %v212
    %v245 = vunpack.c.l.b16 %v213
    %v246 = vunpack.c.l.b16 %v214
    %v247 = vunpack.c.l.b16 %v215
    %v248 = vunpack.c.l.b16 %v216
    %v249 = vunpack.c.l.b16 %v217
    %v250 = vpack.c.b16 %v235, %v234
    %v251 = vpack.c.b16 %v237, %v236
    %v252 = vpack.c.b16 %v239, %v238
    %v253 = vpack.c.b16 %v241, %v240
    %v254 = vpack.c.b16 %v243, %v242
    %v255 = vpack.c.b16 %v245, %v244
    %v256 = vpack.c.b16 %v247, %v246
    %v257 = vpack.c.b16 %v249, %v248
    %266 = vmatprep.subr.bf16.mxu0 0
    %267 = vmatpush1.bf16.msra.mxu0 %v257
    %268 = vmatprep.subr.bf16.mxu0 0
    %269 = vmatpush1.bf16.msra.mxu0 %v256
    %270 = vmatprep.subr.bf16.mxu0 0
    %271 = vmatpush1.bf16.msra.mxu0 %v255
    %272 = vmatprep.subr.bf16.mxu0 0
    %273 = vmatpush1.bf16.msra.mxu0 %v254
    %274 = vmatprep.subr.bf16.mxu0 0
    %275 = vmatpush1.bf16.msra.mxu0 %v253
    %276 = vmatprep.subr.bf16.mxu0 0
    %277 = vmatpush1.bf16.msra.mxu0 %v252
    %278 = vmatprep.subr.bf16.mxu0 0
    %279 = vmatpush1.bf16.msra.mxu0 %v251
    %280 = vmatprep.subr.bf16.mxu0 0
    %281 = vmatpush1.bf16.msra.mxu0 %v250
    %282 = vmatprep.subr.bf16.mxu0 0
    %283 = vmatpush2.bf16.msra.mxu0 0
    %284 = vmatprep.subr.bf16.mxu0 0
    %285 = vmatpush2.bf16.msra.mxu0 0
    %286 = vmatprep.subr.bf16.mxu0 0
    %287 = vmatpush2.bf16.msra.mxu0 0
    %288 = vmatprep.subr.bf16.mxu0 0
    %289 = vmatpush2.bf16.msra.mxu0 0
    %290 = vmatprep.subr.bf16.mxu0 0
    %291 = vmatpush2.bf16.msra.mxu0 0
    %292 = vmatprep.subr.bf16.mxu0 0
    %293 = vmatpush2.bf16.msra.mxu0 0
    %294 = vmatprep.subr.bf16.mxu0 0
    %295 = vmatpush2.bf16.msra.mxu0 0
    %296 = vmatprep.subr.bf16.mxu0 0
    %297 = vmatpush2.bf16.msra.mxu0 0
    %298 = vmatprep.mubr.bf16.mxu0 0
    %299 = vmatmul.mubr.bf16.gmra.mxu0 %v201
    %v300 = vpop.f32.mrf.mxu0
    %v301 = vadd.f32 0.0, %v300
    %v302 = vpop.f32.mrf.mxu0
    %v303 = vpop.f32.mrf.mxu0
    %v304 = vadd.f32 0.0, %v303
    %v305 = vpop.f32.mrf.mxu0
    %306 = vdwg.mxu0
    %v307 = vadd.f32 %v199, %v301
    %v308 = vadd.f32 %v200, %v304
    %309 = vst [vmem:[#allocation2] sm:$0xff] %v307
    %310 = vst [vmem:[#allocation2 + $0x8] sm:$0xff] %v308
    // Predicated region
    $region38: #{tpu_custom_call.1} parent=1 // pred_check
      %p311 = pneg %p63
    $region39: #{tpu_custom_call.1} parent=1 // pred_check_branch
      %313 = sbr.rel (%p311) target = $region41
    $region40: #{tpu_custom_call.1} parent=1 // pred_region
      %v314 = vld [vmem:[#allocation2] sm:$0xff]
      %v315 = vld [vmem:[#allocation2 + $0x8] sm:$0xff]
      %v316 = vld [vmem:[%s4] sm:$0x1]
      %v318 = vlaneseq
      %v319 = vshrl.u32 %v318, 7
      %v320 = vsub.s32 0, %v319
      %v321 = vrot.slane %v316, %v320
      %v323 = vadd.f32 %v314, %v321
      %v324 = vadd.f32 %v315, %v321
      %325 = vst [vmem:[#allocation9] sm:$0xff] %v323
      %326 = vst [vmem:[#allocation9 + $0x8] sm:$0xff] %v324
    $region41: #{tpu_custom_call.1} parent=1 // pred_fallthru
      _
    // Predicated region
    $region42: #{tpu_custom_call.1} parent=1 // pred_check
      _
    $region43: #{tpu_custom_call.1} parent=1 // pred_check_branch
      %328 = sbr.rel (0) target = $region45
    $region44: #{tpu_custom_call.1} parent=1 // pred_region
      %s330 = ssub.s32 256, 256
      %331 = vsyncadd [#allocation5], %s330
      %s332 = sshll.u32 [#allocation9], 4
      %s333 = int_to_ptr.vmem [resolvable:$true] %s332
      %338 = dma.vmem_to_hbm [thread:$0]  %s333, 256, %s5, [#allocation5], 128, 128, 8
    $region45: #{tpu_custom_call.1} parent=1 // pred_fallthru
      _
    // Predicated region
    $region46: #{tpu_custom_call.1} parent=1 // pred_check
      _
    $region47: #{tpu_custom_call.1} parent=1 // pred_check_branch
      %340 = sbr.rel (0) target = $region49
    $region48: #{tpu_custom_call.1} parent=1 // pred_region
      %341 = dma.done [#allocation5], 256
    $region49: #{tpu_custom_call.1} parent=1 // pred_fallthru
      _
    %342 = vsyncpa [#allocation4], 1
    %343 = vsyncpa [#allocation7], 1
    %344 = vsyncpa [#allocation5], 1

</llo_original>
